<compile_context>
chip_gen: v5e
topology: v5e:2x2
jax: 0.10.0
libtpu: 0.0.40
codegen_flags: <defaults>
</compile_context>

<pallas_src>
import jax
import jax.numpy as jnp
import numpy as np
from jax.experimental import pallas as pl
from jax.experimental.pallas import tpu as pltpu

_LANE = 128       # TPU lane width
_SUBLANE = 8      # TPU sublane width (f32)
_NEG_BIG = -1e30  # bias for padded output columns -> softmax weight exactly 0


def _round_up(n, m):
    return ((n + m - 1) // m) * m


def rnn7_kernel(x_ref, w1_ref, b1_ref, w2_ref, b2_ref, o_ref):
    # fc1 + tanh  (padded hidden columns: weights/bias are 0 -> tanh(0)=0)
    h = jnp.dot(x_ref[...], w1_ref[...], preferred_element_type=jnp.float32)
    h = jnp.tanh(h + b1_ref[...])
    # l1  (padded output columns: weights 0, bias -1e30 -> exp() == 0)
    logits = jnp.dot(h, w2_ref[...], preferred_element_type=jnp.float32)
    logits = logits + b2_ref[...]
    # numerically-stable softmax over the lane-dense, 128-wide padded last dim
    m = jnp.max(logits, axis=-1, keepdims=True)
    e = jnp.exp(logits - m)
    denom = jnp.sum(e, axis=-1, keepdims=True)            # >= 1, never zero
    r = pl.reciprocal(denom, approx=True)                  # EUP vrcp
    r = r * (2.0 - denom * r)                              # Newton step -> f32 accuracy
    probs = e * r
    # store only the valid output columns (narrow HBM writeback)
    out_cols = o_ref.shape[-1]
    o_ref[...] = probs[:, :out_cols].astype(o_ref.dtype)


def prepare_rnn7_params(w1, b1, w2, b2):
    """One-time hoisted parameter repack (PyTorch nn.Linear layout in).

      w1: (hidden_size1, input_size),  b1: (hidden_size1,)
      w2: (output_size,  hidden_size1), b2: (output_size,)

    Returns padded, transposed params ready for the kernel.
    """
    f32 = jnp.float32
    h1, in_size = w1.shape
    out_size = w2.shape[0]
    h1_p = _round_up(h1, _LANE)
    out_p = _round_up(out_size, _LANE)

    w1_t = jnp.zeros((in_size, h1_p), f32).at[:, :h1].set(w1.T.astype(f32))
    b1_p = jnp.zeros((1, h1_p), f32).at[:, :h1].set(b1.astype(f32).reshape(1, h1))
    w2_t = jnp.zeros((h1_p, out_p), f32).at[:h1, :out_size].set(w2.T.astype(f32))
    b2_p = jnp.full((1, out_p), _NEG_BIG, f32).at[:, :out_size].set(
        b2.astype(f32).reshape(1, out_size))

    return {"w1_t": w1_t, "b1_p": b1_p, "w2_t": w2_t, "b2_p": b2_p,
            "out_size": out_size, "in_size": in_size}


def rnn7_forward(x, params, *, block_rows=4096):
    """Forward pass of RNN7 using pre-prepared params.

    Args:
      x:      (B, input_size)
      params: output of prepare_rnn7_params (constant across calls)
    Returns:
      (B, output_size) softmax probabilities, float32.
    """
    f32 = jnp.float32
    x = x.astype(f32)
    B, in_size = x.shape
    w1_t, b1_p, w2_t, b2_p = (params["w1_t"], params["b1_p"],
                              params["w2_t"], params["b2_p"])
    out_size = params["out_size"]
    assert in_size == params["in_size"]

    if B <= block_rows:
        # ---- small/medium batch: single invocation, no grid machinery ----
        return pl.pallas_call(
            rnn7_kernel,
            out_shape=jax.ShapeDtypeStruct((B, out_size), f32),
            in_specs=[pl.BlockSpec(memory_space=pltpu.MemorySpace.VMEM)] * 5,
            out_specs=pl.BlockSpec(memory_space=pltpu.MemorySpace.VMEM),
        )(x, w1_t, b1_p, w2_t, b2_p)

    # ---- large batch: tile the batch axis, weights VMEM-resident ----
    tb = _round_up(block_rows, _SUBLANE)
    grid = (pl.cdiv(B, tb),)  # ragged last block handled by Pallas masking
    return pl.pallas_call(
        rnn7_kernel,
        out_shape=jax.ShapeDtypeStruct((B, out_size), f32),
        grid=grid,
        in_specs=[
            pl.BlockSpec((tb, in_size), lambda i: (i, 0)),
            pl.BlockSpec(w1_t.shape, lambda i: (0, 0)),   # resident weights
            pl.BlockSpec(b1_p.shape, lambda i: (0, 0)),
            pl.BlockSpec(w2_t.shape, lambda i: (0, 0)),
            pl.BlockSpec(b2_p.shape, lambda i: (0, 0)),
        ],
        out_specs=pl.BlockSpec((tb, out_size), lambda i: (i, 0)),
        compiler_params=pltpu.CompilerParams(
            dimension_semantics=("parallel",)),  # shards batch across TCs on v7x
    )(x, w1_t, b1_p, w2_t, b2_p)


def reference_forward(x, w1, b1, w2, b2):
    h = jnp.tanh(x @ w1.T + b1)
    logits = h @ w2.T + b2
    return jax.nn.softmax(logits, axis=-1)


if __name__ == "__main__":
    # Shapes implied by the module: input_size -> hidden_size1 -> output_size
    batch, input_size, hidden_size1, output_size = 8, 32, 64, 16

    key = jax.random.PRNGKey(0)
    k_x, k_w1, k_b1, k_w2, k_b2, k_x2 = jax.random.split(key, 6)

    x = jax.random.normal(k_x, (batch, input_size), dtype=jnp.float32)

    # Deterministic param init (mimicking nn.Linear's uniform fan-in scaling).
    lim1 = 1.0 / np.sqrt(input_size)
    w1 = jax.random.uniform(k_w1, (hidden_size1, input_size),
                            minval=-lim1, maxval=lim1, dtype=jnp.float32)
    b1 = jax.random.uniform(k_b1, (hidden_size1,),
                            minval=-lim1, maxval=lim1, dtype=jnp.float32)
    lim2 = 1.0 / np.sqrt(hidden_size1)
    w2 = jax.random.uniform(k_w2, (output_size, hidden_size1),
                            minval=-lim2, maxval=lim2, dtype=jnp.float32)
    b2 = jax.random.uniform(k_b2, (output_size,),
                            minval=-lim2, maxval=lim2, dtype=jnp.float32)

    # One-time (hoisted) parameter repack; reused across all forward calls.
    params = prepare_rnn7_params(w1, b1, w2, b2)
    for name in ("w1_t", "b1_p", "w2_t", "b2_p"):
        params[name] = jax.block_until_ready(params[name])

    # Small-batch path (single invocation, no grid).
    out = jax.block_until_ready(rnn7_forward(x, params))
    ref = reference_forward(x, w1, b1, w2, b2)
    np.testing.assert_allclose(np.asarray(out), np.asarray(ref),
                               rtol=1e-5, atol=1e-5)

    # Batched-grid path (parallel batch axis, resident weights, ragged last tile:
    # 300 rows with 128-row tiles -> 3 grid steps, last one 44 valid rows).
    x_big = jax.random.normal(k_x2, (300, input_size), dtype=jnp.float32)
    out_big = jax.block_until_ready(rnn7_forward(x_big, params, block_rows=128))
    ref_big = reference_forward(x_big, w1, b1, w2, b2)
    np.testing.assert_allclose(np.asarray(out_big), np.asarray(ref_big),
                               rtol=1e-5, atol=1e-5)

    print("KERNEL_OK")
</pallas_src>

<mosaic_0001>
module attributes {stable_mosaic.version = 11 : i64} {
  func.func @rnn7_kernel(%arg0: memref<8x32xf32, #tpu.memory_space<vmem>>, %arg1: memref<32x128xf32, #tpu.memory_space<vmem>>, %arg2: memref<1x128xf32, #tpu.memory_space<vmem>>, %arg3: memref<128x128xf32, #tpu.memory_space<vmem>>, %arg4: memref<1x128xf32, #tpu.memory_space<vmem>>, %arg5: memref<8x16xf32, #tpu.memory_space<vmem>>) attributes {dimension_semantics = [], scalar_prefetch = 0 : i64, scratch_operands = 0 : i64, tpu.core_type = #tpu.core_type<tc>} {
    %c0 = arith.constant 0 : index
    %c0_0 = arith.constant 0 : index
    %0 = vector.load %arg0[%c0, %c0_0] : memref<8x32xf32, #tpu.memory_space<vmem>>, vector<8x32xf32>
    %c0_1 = arith.constant 0 : index
    %c0_2 = arith.constant 0 : index
    %1 = vector.load %arg1[%c0_1, %c0_2] : memref<32x128xf32, #tpu.memory_space<vmem>>, vector<32x128xf32>
    %cst = arith.constant dense<0.000000e+00> : vector<8x128xf32>
    %2 = tpu.matmul %0, %1, %cst {dimension_numbers = #tpu.dot_dimension_numbers<[1], [0], [0], [1], [0, 0, 1, 1], [], []>} : vector<8x32xf32>, vector<32x128xf32>, vector<8x128xf32> -> vector<8x128xf32>
    %c0_3 = arith.constant 0 : index
    %c0_4 = arith.constant 0 : index
    %3 = vector.load %arg2[%c0_3, %c0_4] : memref<1x128xf32, #tpu.memory_space<vmem>>, vector<1x128xf32>
    %4 = vector.broadcast %3 : vector<1x128xf32> to vector<8x128xf32>
    %5 = arith.addf %2, %4 : vector<8x128xf32>
    %6 = math.tanh %5 : vector<8x128xf32>
    %c0_5 = arith.constant 0 : index
    %c0_6 = arith.constant 0 : index
    %7 = vector.load %arg3[%c0_5, %c0_6] : memref<128x128xf32, #tpu.memory_space<vmem>>, vector<128x128xf32>
    %cst_7 = arith.constant dense<0.000000e+00> : vector<8x128xf32>
    %8 = tpu.matmul %6, %7, %cst_7 {dimension_numbers = #tpu.dot_dimension_numbers<[1], [0], [0], [1], [0, 0, 1, 1], [], []>} : vector<8x128xf32>, vector<128x128xf32>, vector<8x128xf32> -> vector<8x128xf32>
    %c0_8 = arith.constant 0 : index
    %c0_9 = arith.constant 0 : index
    %9 = vector.load %arg4[%c0_8, %c0_9] : memref<1x128xf32, #tpu.memory_space<vmem>>, vector<1x128xf32>
    %10 = vector.broadcast %9 : vector<1x128xf32> to vector<8x128xf32>
    %11 = arith.addf %8, %10 : vector<8x128xf32>
    %cst_10 = arith.constant dense<0xFF800000> : vector<8xf32>
    %12 = vector.multi_reduction <maximumf>, %11, %cst_10 [1] : vector<8x128xf32> to vector<8xf32>
    %13 = vector.shape_cast %12 : vector<8xf32> to vector<8x1xf32>
    %14 = vector.broadcast %13 : vector<8x1xf32> to vector<8x128xf32>
    %15 = arith.subf %11, %14 : vector<8x128xf32>
    %16 = math.exp %15 : vector<8x128xf32>
    %cst_11 = arith.constant dense<0.000000e+00> : vector<8xf32>
    %17 = vector.multi_reduction <add>, %16, %cst_11 [1] : vector<8x128xf32> to vector<8xf32>
    %18 = vector.shape_cast %17 : vector<8xf32> to vector<8x1xf32>
    %19 = tpu.reciprocal %18 {approx = true} : vector<8x1xf32> -> vector<8x1xf32>
    %20 = arith.mulf %18, %19 : vector<8x1xf32>
    %cst_12 = arith.constant 2.000000e+00 : f32
    %21 = vector.broadcast %cst_12 : f32 to vector<8x1xf32>
    %22 = arith.subf %21, %20 : vector<8x1xf32>
    %23 = arith.mulf %19, %22 : vector<8x1xf32>
    %24 = vector.broadcast %23 : vector<8x1xf32> to vector<8x128xf32>
    %25 = arith.mulf %16, %24 : vector<8x128xf32>
    %26 = vector.extract_strided_slice %25 {offsets = [0, 0], sizes = [8, 16], strides = [1, 1]} : vector<8x128xf32> to vector<8x16xf32>
    %c0_13 = arith.constant 0 : index
    %c0_14 = arith.constant 0 : index
    %27 = vector.load %arg5[%c0_13, %c0_14] : memref<8x16xf32, #tpu.memory_space<vmem>>, vector<8x16xf32>
    tpu.vector_store %arg5[%c0_13, %c0_14], %26 {strides = array<i32>} : memref<8x16xf32, #tpu.memory_space<vmem>>, vector<8x16xf32>,
    return
  }
}

</mosaic_0001>

<llo_original>
// kernel: tpu_custom_call.1
$region0: #{tpu_custom_call.1}
  #allocation0 [shape = 'u32[]', space=smem, size = 0x4, offset = 0x4, fixed_abs, tag = 'smem constant byte address 0x4 - core index']
  #allocation1 [shape = 'u32[72,128]{1,0:T(1,128)}', space=vmem, size = 0x9000, scoped, tag = 'internal scratch']
  %s0 = inlined_call_operand.hbm [shape: f32[8,32], index: 0, kind: input, shape index: {}]
  %s1 = inlined_call_operand.hbm [shape: f32[32,128], index: 1, kind: input, shape index: {}]
  %s2 = inlined_call_operand.vmem [shape: f32[1,128], index: 2, kind: input, shape index: {}]
  %s3 = inlined_call_operand.hbm [shape: f32[128,128], index: 3, kind: input, shape index: {}]
  %s4 = inlined_call_operand.vmem [shape: f32[1,128], index: 4, kind: input, shape index: {}]
  %s5 = inlined_call_operand.hbm [shape: f32[8,16], index: 5, kind: output, shape index: {}]
  %s6 = sld [smem:[#allocation0]]
  $region42: #{tpu_custom_call.1} parent=0
    _
  %s8 = ssub.s32 1, %s6
  %s9 = scalar_select 0, %s8, %s6
  $region1: #{tpu_custom_call.1} parent=0
    #allocation2 [shape = 'u8[4096]{0}', space=vmem, size = 0x1000, scoped, tag = 'input window, operand 0, single buffered']
    #allocation3 [shape = 's32[1]{0}', space=sflag, size = 0x4, scoped, tag = 'scoped memory for tpu_custom_call.1']
    #allocation4 [shape = 's32[1]{0}', space=sflag, size = 0x4, scoped, tag = 'scoped memory for tpu_custom_call.1']
    #allocation5 [shape = 'u8[16384]{0}', space=vmem, size = 0x4000, scoped, tag = 'input window, operand 1, single buffered']
    #allocation6 [shape = 's32[1]{0}', space=sflag, size = 0x4, scoped, tag = 'scoped memory for tpu_custom_call.1']
    #allocation7 [shape = 'u8[65536]{0}', space=vmem, size = 0x10000, scoped, tag = 'input window, operand 3, single buffered']
    #allocation8 [shape = 'u8[4096]{0}', space=vmem, size = 0x1000, scoped, tag = 'output window, operand 0, single buffered']
    %10 = vsyncpa [#allocation3], 0
    %11 = vsyncpa [#allocation6], 0
    %12 = vsyncpa [#allocation4], 0
    // Predicated region
    $region2: #{tpu_custom_call.1} parent=1 // pred_check
      _
    $region3: #{tpu_custom_call.1} parent=1 // pred_check_branch
      %14 = sbr.rel (0) target = $region5
    $region4: #{tpu_custom_call.1} parent=1 // pred_region
      %16 = vsyncadd [#allocation3], 0
      %s18 = sshll.u32 %s0, 4
      %s19 = int_to_ptr.hbm [resolvable:$true] %s18
      %s20 = sshll.u32 [#allocation2], 4
      %s21 = int_to_ptr.vmem [resolvable:$true] %s20
      %23 = dma.hbm_to_vmem [thread:$0]  %s19, 128, %s21, [#allocation3]
    $region5: #{tpu_custom_call.1} parent=1 // pred_fallthru
      _
    // Predicated region
    $region6: #{tpu_custom_call.1} parent=1 // pred_check
      _
    $region7: #{tpu_custom_call.1} parent=1 // pred_check_branch
      %25 = sbr.rel (0) target = $region9
    $region8: #{tpu_custom_call.1} parent=1 // pred_region
      %27 = vsyncadd [#allocation6], 0
      %s28 = sshll.u32 %s1, 4
      %s29 = int_to_ptr.hbm [resolvable:$true] %s28
      %s30 = sshll.u32 [#allocation5], 4
      %s31 = int_to_ptr.vmem [resolvable:$true] %s30
      %36 = dma.hbm_to_vmem [thread:$0]  %s29, 512, %s31, [#allocation6], 128, 128, 8
    $region9: #{tpu_custom_call.1} parent=1 // pred_fallthru
      _
    // Predicated region
    $region10: #{tpu_custom_call.1} parent=1 // pred_check
      _
    $region11: #{tpu_custom_call.1} parent=1 // pred_check_branch
      %38 = sbr.rel (0) target = $region13
    $region12: #{tpu_custom_call.1} parent=1 // pred_region
      _
    $region13: #{tpu_custom_call.1} parent=1 // pred_fallthru
      _
    // Predicated region
    $region14: #{tpu_custom_call.1} parent=1 // pred_check
      _
    $region15: #{tpu_custom_call.1} parent=1 // pred_check_branch
      %40 = sbr.rel (0) target = $region17
    $region16: #{tpu_custom_call.1} parent=1 // pred_region
      %42 = vsyncadd [#allocation6], 0
      %s43 = sshll.u32 %s3, 4
      %s44 = int_to_ptr.hbm [resolvable:$true] %s43
      %s45 = sshll.u32 [#allocation7], 4
      %s46 = int_to_ptr.vmem [resolvable:$true] %s45
      %51 = dma.hbm_to_vmem [thread:$0]  %s44, 2048, %s46, [#allocation6], 128, 128, 8
    $region17: #{tpu_custom_call.1} parent=1 // pred_fallthru
      _
    // Predicated region
    $region18: #{tpu_custom_call.1} parent=1 // pred_check
      _
    $region19: #{tpu_custom_call.1} parent=1 // pred_check_branch
      %53 = sbr.rel (0) target = $region21
    $region20: #{tpu_custom_call.1} parent=1 // pred_region
      _
    $region21: #{tpu_custom_call.1} parent=1 // pred_fallthru
      _
    // Predicated region
    $region22: #{tpu_custom_call.1} parent=1 // pred_check
      _
    $region23: #{tpu_custom_call.1} parent=1 // pred_check_branch
      %55 = sbr.rel (0) target = $region25
    $region24: #{tpu_custom_call.1} parent=1 // pred_region
      %57 = dma.done [#allocation3], 128
    $region25: #{tpu_custom_call.1} parent=1 // pred_fallthru
      _
    // Predicated region
    $region26: #{tpu_custom_call.1} parent=1 // pred_check
      _
    $region27: #{tpu_custom_call.1} parent=1 // pred_check_branch
      %59 = sbr.rel (0) target = $region29
    $region28: #{tpu_custom_call.1} parent=1 // pred_region
      %61 = dma.done [#allocation6], 512
    $region29: #{tpu_custom_call.1} parent=1 // pred_fallthru
      _
    // Predicated region
    $region30: #{tpu_custom_call.1} parent=1 // pred_check
      _
    $region31: #{tpu_custom_call.1} parent=1 // pred_check_branch
      %63 = sbr.rel (0) target = $region33
    $region32: #{tpu_custom_call.1} parent=1 // pred_region
      %65 = dma.done [#allocation6], 2048
    $region33: #{tpu_custom_call.1} parent=1 // pred_fallthru
      _
    %v66 = vld [vmem:[#allocation2] sm:$0xff]
    %v67 = vld [vmem:[#allocation5] sm:$0xff]
    %v68 = vld [vmem:[#allocation5 + $0x8] sm:$0xff]
    %v69 = vld [vmem:[#allocation5 + $0x10] sm:$0xff]
    %v70 = vld [vmem:[#allocation5 + $0x18] sm:$0xff]
    %v71 = vld [vmem:[%s2] sm:$0x1]
    %v73 = vperm.slane %v71, 0
    %vm75 = vcmask 261120
    %v77 = vsel %vm75, %v66, 0
    %79 = vmatpush.msra.mxu0 0.0
    %80 = vmatpush.msra.mxu0 0.0
    %81 = vmatpush.msra.mxu0 0.0
    %82 = vmatpush.msra.mxu0 0.0
    %83 = vmatpush.msra.mxu0 0.0
    %84 = vmatpush.msra.mxu0 0.0
    %85 = vmatpush.msra.mxu0 0.0
    %86 = vmatpush.msra.mxu0 0.0
    %87 = vmatpush.msra.mxu0 0.0
    %88 = vmatpush.msra.mxu0 0.0
    %89 = vmatpush.msra.mxu0 0.0
    %90 = vmatpush.msra.mxu0 0.0
    %91 = vmatpush.msra.mxu0 %v70
    %92 = vmatpush.msra.mxu0 %v69
    %93 = vmatpush.msra.mxu0 %v68
    %94 = vmatpush.msra.mxu0 %v67
    %95 = vmatmul.f32.gmra.mxu0 %v77
    %v96 = vpop.f32.mrf.mxu0
    %v97 = vadd.f32 %v73, %v96
    %98 = vdwg.mxu0
    %v99 = vtanh.pop %v97
    %v100 = vld [vmem:[#allocation7] sm:$0xff]
    %v101 = vld [vmem:[#allocation7 + $0x8] sm:$0xff]
    %v102 = vld [vmem:[#allocation7 + $0x10] sm:$0xff]
    %v103 = vld [vmem:[#allocation7 + $0x18] sm:$0xff]
    %v104 = vld [vmem:[#allocation7 + $0x20] sm:$0xff]
    %v105 = vld [vmem:[#allocation7 + $0x28] sm:$0xff]
    %v106 = vld [vmem:[#allocation7 + $0x30] sm:$0xff]
    %v107 = vld [vmem:[#allocation7 + $0x38] sm:$0xff]
    %v108 = vld [vmem:[#allocation7 + $0x40] sm:$0xff]
    %v109 = vld [vmem:[#allocation7 + $0x48] sm:$0xff]
    %v110 = vld [vmem:[#allocation7 + $0x50] sm:$0xff]
    %v111 = vld [vmem:[#allocation7 + $0x58] sm:$0xff]
    %v112 = vld [vmem:[#allocation7 + $0x60] sm:$0xff]
    %v113 = vld [vmem:[#allocation7 + $0x68] sm:$0xff]
    %v114 = vld [vmem:[#allocation7 + $0x70] sm:$0xff]
    %v115 = vld [vmem:[#allocation7 + $0x78] sm:$0xff]
    %v116 = vld [vmem:[%s4] sm:$0x1]
    %v118 = vperm.slane %v116, 0
    %120 = vmatpush.msra.mxu0 %v115
    %121 = vmatpush.msra.mxu0 %v114
    %122 = vmatpush.msra.mxu0 %v113
    %123 = vmatpush.msra.mxu0 %v112
    %124 = vmatpush.msra.mxu0 %v111
    %125 = vmatpush.msra.mxu0 %v110
    %126 = vmatpush.msra.mxu0 %v109
    %127 = vmatpush.msra.mxu0 %v108
    %128 = vmatpush.msra.mxu0 %v107
    %129 = vmatpush.msra.mxu0 %v106
    %130 = vmatpush.msra.mxu0 %v105
    %131 = vmatpush.msra.mxu0 %v104
    %132 = vmatpush.msra.mxu0 %v103
    %133 = vmatpush.msra.mxu0 %v102
    %134 = vmatpush.msra.mxu0 %v101
    %135 = vmatpush.msra.mxu0 %v100
    %136 = vmatmul.f32.gmra.mxu0 %v99
    %v137 = vpop.f32.mrf.mxu0
    %v138 = vadd.f32 %v118, %v137
    %139 = vdwg.mxu0
    %140 = vmax.xlane.f32.xlu0 %v138
    %v141 = vpop.xlane.xlu0 %140
    %v142 = vsub.f32 %v138, %v141
    %v143 = vmul.f32 %v142, 1.442695
    %v144 = vpow.pop %v143
    %145 = vadd.xlane.f32.xlu0 %v144
    %v146 = vpop.xlane.xlu0 %145
    %v147 = vrcp.pop %v146
    %v148 = vmul.f32 %v146, %v147
    %v149 = vsub.f32 2.0, %v148
    %v150 = vmul.f32 %v147, %v149
    %v151 = vmul.f32 %v144, %v150
    %vm152 = vcmask 130048
    %153 = vst.msk [vmem:[#allocation8] sm:$0xff] %vm152, %v151
    // Predicated region
    $region34: #{tpu_custom_call.1} parent=1 // pred_check
      _
    $region35: #{tpu_custom_call.1} parent=1 // pred_check_branch
      %155 = sbr.rel (0) target = $region37
    $region36: #{tpu_custom_call.1} parent=1 // pred_region
      %157 = vsyncadd [#allocation4], 0
      %s159 = sshll.u32 [#allocation8], 4
      %s160 = int_to_ptr.vmem [resolvable:$true] %s159
      %s161 = sshll.u32 %s5, 4
      %s162 = int_to_ptr.hbm [resolvable:$true] %s161
      %164 = dma.vmem_to_hbm [thread:$0]  %s160, 128, %s162, [#allocation4]
    $region37: #{tpu_custom_call.1} parent=1 // pred_fallthru
      _
    // Predicated region
    $region38: #{tpu_custom_call.1} parent=1 // pred_check
      _
    $region39: #{tpu_custom_call.1} parent=1 // pred_check_branch
      %166 = sbr.rel (0) target = $region41
    $region40: #{tpu_custom_call.1} parent=1 // pred_region
      %168 = dma.done [#allocation4], 128
    $region41: #{tpu_custom_call.1} parent=1 // pred_fallthru
      _
    %169 = vsyncpa [#allocation3], 1
    %170 = vsyncpa [#allocation6], 1
    %171 = vsyncpa [#allocation4], 1

</llo_original>
